<compile_context>
chip_gen: v7x
topology: tpu7x:2x2x1
jax: 0.10.0
libtpu: 0.0.40
codegen_flags: <defaults>
</compile_context>

<pallas_src>
import functools

import jax
import jax.numpy as jnp
from jax import lax
from jax.experimental import pallas as pl
from jax.experimental.pallas import tpu as pltpu


_SUBLANE = 16  # sublane-safe row granularity for both f32 (8) and bf16 (16)


def _round_up(x, m):
    return ((x + m - 1) // m) * m


# ----------------------------------------------------------------------------
# Kernel
# ----------------------------------------------------------------------------
def _self_output_kernel(x_ref, res_ref, w_ref, p_ref, o_ref, *, eps):
    # x_ref:   (tm, H) tile of hidden_states rows
    # res_ref: (tm, H) tile of input_tensor rows (residual)
    # w_ref:   (H, H)  dense weight, pre-transposed so y = x @ W  (resident)
    # p_ref:   (3, H)  packed f32 params: [bias; ln_gamma; ln_beta] (resident)
    #
    # MXU matmul in the operands' native dtype (bf16 runs at full MXU rate and
    # halves HBM/VMEM bytes), f32 accumulation.
    y = jnp.dot(x_ref[...], w_ref[...], preferred_element_type=jnp.float32)

    p = p_ref[...]                      # (3, H) f32
    y = y + p[0:1, :]                   # bias
    # Dropout: eval-mode identity (inference).
    # TODO(synk): training-mode dropout (pltpu.prng_random_bits mask) not implemented.
    y = y + res_ref[...].astype(jnp.float32)

    # LayerNorm over the hidden (lane) axis in f32.  Centered two-pass form
    # (matches torch.nn.LayerNorm numerics); the XLU reductions are hidden
    # under the MXU/DMA critical path, so no need for the E[y^2]-mean^2 trick.
    mean = jnp.mean(y, axis=-1, keepdims=True)
    centered = y - mean
    var = jnp.mean(centered * centered, axis=-1, keepdims=True)
    inv = lax.rsqrt(var + eps)
    out = centered * inv * p[1:2, :] + p[2:3, :]

    o_ref[...] = out.astype(o_ref.dtype)


# ----------------------------------------------------------------------------
# Parameter preparation (do ONCE at load time, not per forward call)
# ----------------------------------------------------------------------------
def prepare_dense_weight(w):
    """Torch Linear weight (H_out, H_in) -> (H_in, H_out) so y = x @ W."""
    return jnp.asarray(w).T


def prepare_params(bias, gamma, beta):
    """Pack bias / LN gamma / LN beta into one resident (3, H) f32 block."""
    return jnp.stack(
        [jnp.asarray(bias), jnp.asarray(gamma), jnp.asarray(beta)], axis=0
    ).astype(jnp.float32)


# ----------------------------------------------------------------------------
# Tile selection / VMEM budgeting
# ----------------------------------------------------------------------------
def _select_row_tile(rows, H, in_bytes, w_bytes, out_bytes):
    rows_r = _round_up(rows, _SUBLANE)

    # VMEM budget for the pipeline.  40 MiB keeps us inside v7x's 64 MiB/TC
    # with headroom; v5e/v6e (128 MiB) are comfortably within budget too.
    budget = 40 << 20
    fixed = 2 * H * H * w_bytes + 2 * 3 * H * 4          # weight (2 bufs) + params
    per_row = 2 * H * (2 * in_bytes + out_bytes)         # x + residual + out, 2 bufs
    vmem_cap = max(_SUBLANE, (budget - fixed) // per_row) if budget > fixed else _SUBLANE
    hard_cap = 2048 if max(in_bytes, out_bytes) <= 2 else 1024
    cap = min(vmem_cap, hard_cap)

    # Smallest even tile count whose tile fits the cap: big tiles amortize the
    # ~0.35 us per-grid-step overhead, and >= 2 (even) tiles keep both v7x
    # TensorCores busy and balanced (v5e/v6e just see one cheap extra step).
    n = max(2, pl.cdiv(rows_r, cap))
    if n % 2:
        n += 1
    tm = _round_up(pl.cdiv(rows_r, n), _SUBLANE)
    if tm >= 512:
        tm = _round_up(tm, 256)        # full 256-wide MXU passes on v6e/v7x

    if rows_r <= 2 * _SUBLANE:         # tiny inputs: single tile of all rows
        tm = rows_r
    return int(max(_SUBLANE, min(tm, rows_r)))


def _vmem_limit_bytes(tm, H, in_bytes, w_bytes, out_bytes):
    est = (2 * tm * H * (2 * in_bytes + out_bytes)       # x / res / out, double-buffered
           + 2 * H * H * w_bytes                         # weight (2 buffers)
           + 2 * 8 * H * 4)                              # packed params (padded)
    est += 2 << 20                                       # compiler scratch headroom
    # Cap at 48 MiB: safe on v7x (64 MiB physical per TC) and plenty on v5e/v6e.
    return int(min(48 << 20, max(32 << 20, _round_up(est, 1 << 20))))


# ----------------------------------------------------------------------------
# Wrapper
# ----------------------------------------------------------------------------
def luke_self_output(hidden_states, input_tensor, w_t, params, *, eps=1e-12,
                     row_tile=None):
    """hidden_states, input_tensor: [B, S, H].

    w_t: (H_in, H_out) pre-transposed weight (prepare_dense_weight).
    params: (3, H) f32 packed bias/gamma/beta (prepare_params).
    """
    B, S, H = hidden_states.shape
    rows = B * S

    x2 = hidden_states.reshape(rows, H)
    r2 = input_tensor.reshape(rows, H)

    in_bytes = jnp.dtype(x2.dtype).itemsize
    w_bytes = jnp.dtype(w_t.dtype).itemsize
    out_bytes = jnp.dtype(hidden_states.dtype).itemsize

    if row_tile is None:
        row_tile = _select_row_tile(rows, H, in_bytes, w_bytes, out_bytes)
    row_tile = _round_up(int(row_tile), _SUBLANE)

    # No host-side padding: the last (partial) block's extra rows are read as
    # garbage, but every row is independent (matmul + row-local LayerNorm) and
    # the partial-block store is masked by Pallas.
    grid = (pl.cdiv(rows, row_tile),)

    kernel = functools.partial(_self_output_kernel, eps=eps)

    # NOTE: real LUKE has H = 768/1024 (lane-aligned); for toy H < 128 the
    # block last dim equals the full array dim, which is allowed (masked
    # stores there are irrelevant at that size).
    out2 = pl.pallas_call(
        kernel,
        out_shape=jax.ShapeDtypeStruct((rows, H), hidden_states.dtype),
        grid_spec=pltpu.PrefetchScalarGridSpec(
            num_scalar_prefetch=0,
            grid=grid,
            in_specs=[
                pl.BlockSpec((row_tile, H), lambda i: (i, 0)),   # x tile
                pl.BlockSpec((row_tile, H), lambda i: (i, 0)),   # residual tile
                pl.BlockSpec((H, H), lambda i: (0, 0)),          # weight (resident)
                pl.BlockSpec((3, H), lambda i: (0, 0)),          # packed bias/gamma/beta
            ],
            out_specs=pl.BlockSpec((row_tile, H), lambda i: (i, 0)),
        ),
        compiler_params=pltpu.CompilerParams(
            dimension_semantics=("parallel",),   # rows shard across v7x TensorCores
            vmem_limit_bytes=_vmem_limit_bytes(row_tile, H, in_bytes, w_bytes, out_bytes),
        ),
    )(x2, r2, w_t, params)

    return out2.reshape(B, S, H)


# ----------------------------------------------------------------------------
# Pure-JAX reference (torch semantics, weight in torch layout (H_out, H_in))
# ----------------------------------------------------------------------------
def _reference(hidden_states, input_tensor, w, b, gamma, beta, eps=1e-12):
    h = hidden_states.astype(jnp.float32)
    r = input_tensor.astype(jnp.float32)
    y = jnp.einsum("bsh,oh->bso", h, w.astype(jnp.float32)) + b.astype(jnp.float32)
    y = y + r
    mean = jnp.mean(y, axis=-1, keepdims=True)
    var = jnp.mean((y - mean) ** 2, axis=-1, keepdims=True)
    out = (y - mean) * lax.rsqrt(var + eps) * gamma.astype(jnp.float32) + beta.astype(jnp.float32)
    return out.astype(hidden_states.dtype)


if __name__ == "__main__":
    eps = 1e-12
    key = jax.random.PRNGKey(0)

    # ---- Test 1: small f32 shape (B=2, S=8, H=32), tight tolerance ----
    B, S, H = 2, 8, 32
    k1, k2, k3, k4, key = jax.random.split(key, 5)
    hidden_states = jax.random.normal(k1, (B, S, H), dtype=jnp.float32)
    input_tensor = jax.random.normal(k2, (B, S, H), dtype=jnp.float32)
    bound = 1.0 / (H ** 0.5)
    w = jax.random.uniform(k3, (H, H), minval=-bound, maxval=bound, dtype=jnp.float32)
    b = jax.random.uniform(k4, (H,), minval=-bound, maxval=bound, dtype=jnp.float32)
    gamma = jnp.ones((H,), dtype=jnp.float32)
    beta = jnp.zeros((H,), dtype=jnp.float32)

    w_t = prepare_dense_weight(w)          # once, at parameter-load time
    params = prepare_params(b, gamma, beta)
    out = luke_self_output(hidden_states, input_tensor, w_t, params, eps=eps)
    out = jax.block_until_ready(out)
    ref = _reference(hidden_states, input_tensor, w, b, gamma, beta, eps=eps)
    assert out.shape == (B, S, H)
    assert jnp.allclose(out, ref, atol=1e-5, rtol=1e-5), "f32 mismatch vs reference"

    # ---- Test 2: bf16, rows=120 -> auto tile 64, grid=(2,), partial (masked)
    # last block exercises the no-padding path ----
    B2, S2, H2 = 3, 40, 128
    k1, k2, k3, k4, key = jax.random.split(key, 5)
    hs_bf = jax.random.normal(k1, (B2, S2, H2), dtype=jnp.float32).astype(jnp.bfloat16)
    it_bf = jax.random.normal(k2, (B2, S2, H2), dtype=jnp.float32).astype(jnp.bfloat16)
    bound2 = 1.0 / (H2 ** 0.5)
    w2 = jax.random.uniform(k3, (H2, H2), minval=-bound2, maxval=bound2,
                            dtype=jnp.float32).astype(jnp.bfloat16)
    b2 = jax.random.uniform(k4, (H2,), minval=-bound2, maxval=bound2,
                            dtype=jnp.float32).astype(jnp.bfloat16)
    gamma2 = jnp.ones((H2,), dtype=jnp.bfloat16)
    beta2 = jnp.zeros((H2,), dtype=jnp.bfloat16)

    w2_t = prepare_dense_weight(w2)
    params2 = prepare_params(b2, gamma2, beta2)
    out2 = luke_self_output(hs_bf, it_bf, w2_t, params2, eps=eps)
    out2 = jax.block_until_ready(out2)
    ref2 = _reference(hs_bf, it_bf, w2, b2, gamma2, beta2, eps=eps)
    assert out2.shape == (B2, S2, H2)
    assert jnp.allclose(out2.astype(jnp.float32), ref2.astype(jnp.float32),
                        atol=3e-2, rtol=3e-2), "bf16 mismatch vs reference"

    print("KERNEL_OK")
</pallas_src>

<mosaic_0001>
module attributes {stable_mosaic.version = 11 : i64} {
  func.func @_self_output_kernel(%arg0: i32, %arg1: memref<16x32xf32, #tpu.memory_space<vmem>>, %arg2: memref<16x32xf32, #tpu.memory_space<vmem>>, %arg3: memref<32x32xf32, #tpu.memory_space<vmem>>, %arg4: memref<3x32xf32, #tpu.memory_space<vmem>>, %arg5: memref<16x32xf32, #tpu.memory_space<vmem>>) attributes {dimension_semantics = [#tpu.dimension_semantics<parallel>], iteration_bounds = array<i64: 1>, scalar_prefetch = 0 : i64, scratch_operands = 0 : i64, tpu.core_type = #tpu.core_type<tc>, window_params = [{transform_indices = @transform_0, window_bounds = array<i64: 16, 32>}, {transform_indices = @transform_1, window_bounds = array<i64: 16, 32>}, {pipeline_mode = #tpu.pipeline_mode<synchronous>, transform_indices = @transform_2, window_bounds = array<i64: 32, 32>}, {pipeline_mode = #tpu.pipeline_mode<synchronous>, transform_indices = @transform_3, window_bounds = array<i64: 3, 32>}, {transform_indices = @transform_4, window_bounds = array<i64: 16, 32>}]} {
    %c0 = arith.constant 0 : index
    %c0_0 = arith.constant 0 : index
    %0 = vector.load %arg1[%c0, %c0_0] : memref<16x32xf32, #tpu.memory_space<vmem>>, vector<16x32xf32>
    %c0_1 = arith.constant 0 : index
    %c0_2 = arith.constant 0 : index
    %1 = vector.load %arg3[%c0_1, %c0_2] : memref<32x32xf32, #tpu.memory_space<vmem>>, vector<32x32xf32>
    %cst = arith.constant dense<0.000000e+00> : vector<16x32xf32>
    %2 = tpu.matmul %0, %1, %cst {dimension_numbers = #tpu.dot_dimension_numbers<[1], [0], [0], [1], [0, 0, 1, 1], [], []>} : vector<16x32xf32>, vector<32x32xf32>, vector<16x32xf32> -> vector<16x32xf32>
    %c0_3 = arith.constant 0 : index
    %c0_4 = arith.constant 0 : index
    %3 = vector.load %arg4[%c0_3, %c0_4] : memref<3x32xf32, #tpu.memory_space<vmem>>, vector<3x32xf32>
    %4 = vector.extract_strided_slice %3 {offsets = [0, 0], sizes = [1, 32], strides = [1, 1]} : vector<3x32xf32> to vector<1x32xf32>
    %5 = vector.broadcast %4 : vector<1x32xf32> to vector<16x32xf32>
    %6 = arith.addf %2, %5 : vector<16x32xf32>
    %c0_5 = arith.constant 0 : index
    %c0_6 = arith.constant 0 : index
    %7 = vector.load %arg2[%c0_5, %c0_6] : memref<16x32xf32, #tpu.memory_space<vmem>>, vector<16x32xf32>
    %8 = arith.addf %6, %7 : vector<16x32xf32>
    %cst_7 = arith.constant dense<0.000000e+00> : vector<16xf32>
    %9 = vector.multi_reduction <add>, %8, %cst_7 [1] : vector<16x32xf32> to vector<16xf32>
    %10 = vector.shape_cast %9 : vector<16xf32> to vector<16x1xf32>
    %cst_8 = arith.constant 3.200000e+01 : f32
    %11 = vector.broadcast %cst_8 : f32 to vector<16x1xf32>
    %12 = arith.divf %10, %11 : vector<16x1xf32>
    %13 = vector.broadcast %12 : vector<16x1xf32> to vector<16x32xf32>
    %14 = arith.subf %8, %13 : vector<16x32xf32>
    %15 = arith.mulf %14, %14 : vector<16x32xf32>
    %cst_9 = arith.constant dense<0.000000e+00> : vector<16xf32>
    %16 = vector.multi_reduction <add>, %15, %cst_9 [1] : vector<16x32xf32> to vector<16xf32>
    %17 = vector.shape_cast %16 : vector<16xf32> to vector<16x1xf32>
    %cst_10 = arith.constant 3.200000e+01 : f32
    %18 = vector.broadcast %cst_10 : f32 to vector<16x1xf32>
    %19 = arith.divf %17, %18 : vector<16x1xf32>
    %cst_11 = arith.constant 9.99999996E-13 : f32
    %20 = vector.broadcast %cst_11 : f32 to vector<16x1xf32>
    %21 = arith.addf %19, %20 : vector<16x1xf32>
    %22 = math.rsqrt %21 : vector<16x1xf32>
    %23 = vector.broadcast %22 : vector<16x1xf32> to vector<16x32xf32>
    %24 = arith.mulf %14, %23 : vector<16x32xf32>
    %25 = vector.extract_strided_slice %3 {offsets = [1, 0], sizes = [1, 32], strides = [1, 1]} : vector<3x32xf32> to vector<1x32xf32>
    %26 = vector.broadcast %25 : vector<1x32xf32> to vector<16x32xf32>
    %27 = arith.mulf %24, %26 : vector<16x32xf32>
    %28 = vector.extract_strided_slice %3 {offsets = [2, 0], sizes = [1, 32], strides = [1, 1]} : vector<3x32xf32> to vector<1x32xf32>
    %29 = vector.broadcast %28 : vector<1x32xf32> to vector<16x32xf32>
    %30 = arith.addf %27, %29 : vector<16x32xf32>
    %c0_12 = arith.constant 0 : index
    %c0_13 = arith.constant 0 : index
    %31 = vector.load %arg5[%c0_12, %c0_13] : memref<16x32xf32, #tpu.memory_space<vmem>>, vector<16x32xf32>
    tpu.vector_store %arg5[%c0_12, %c0_13], %30 {strides = array<i32>} : memref<16x32xf32, #tpu.memory_space<vmem>>, vector<16x32xf32>,
    return
  }
  func.func @transform_0(%arg0: i32) -> (i32, i32) {
    %c0_i32 = arith.constant 0 : i32
    %c0_i32_0 = arith.constant 0 : i32
    return %arg0, %c0_i32 : i32, i32
  }
  func.func @transform_1(%arg0: i32) -> (i32, i32) {
    %c0_i32 = arith.constant 0 : i32
    %c0_i32_0 = arith.constant 0 : i32
    return %arg0, %c0_i32 : i32, i32
  }
  func.func @transform_2(%arg0: i32) -> (i32, i32) {
    %c0_i32 = arith.constant 0 : i32
    %c0_i32_0 = arith.constant 0 : i32
    %c0_i32_1 = arith.constant 0 : i32
    return %c0_i32, %c0_i32_0 : i32, i32
  }
  func.func @transform_3(%arg0: i32) -> (i32, i32) {
    %c0_i32 = arith.constant 0 : i32
    %c0_i32_0 = arith.constant 0 : i32
    %c0_i32_1 = arith.constant 0 : i32
    return %c0_i32, %c0_i32_0 : i32, i32
  }
  func.func @transform_4(%arg0: i32) -> (i32, i32) {
    %c0_i32 = arith.constant 0 : i32
    %c0_i32_0 = arith.constant 0 : i32
    return %arg0, %c0_i32 : i32, i32
  }
}

</mosaic_0001>

<llo_original>
// kernel: tpu_custom_call.1
$region0: #{tpu_custom_call.1}
  #allocation0 [shape = 'u32[]', space=smem, size = 0x4, offset = 0x4, fixed_abs, tag = 'smem constant byte address 0x4 - core index']
  #allocation1 [shape = 'u32[144,128]{1,0:T(1,128)}', space=vmem, size = 0x12000, scoped, tag = 'internal scratch']
  %s0 = inlined_call_operand.hbm [shape: f32[16,32], index: 0, kind: input, shape index: {}]
  %s1 = inlined_call_operand.hbm [shape: f32[16,32], index: 1, kind: input, shape index: {}]
  %s2 = inlined_call_operand.hbm [shape: f32[32,32], index: 2, kind: input, shape index: {}]
  %s3 = inlined_call_operand.vmem [shape: f32[3,32], index: 3, kind: input, shape index: {}]
  %s4 = inlined_call_operand.hbm [shape: f32[16,32], index: 4, kind: output, shape index: {}]
  %s5 = sld [smem:[#allocation0]]
  $region38: #{tpu_custom_call.1} parent=0
    _
  %s7 = ssub.s32 1, %s5
  %s8 = scalar_select 0, %s7, %s5
  $region1: #{tpu_custom_call.1} parent=0
    #allocation2 [shape = 'u8[8192]{0}', space=vmem, size = 0x2000, scoped, tag = 'input window, operand 0, single buffered']
    #allocation3 [shape = 's32[1]{0}', space=sflag, size = 0x4, scoped, tag = 'scoped memory for tpu_custom_call.1']
    #allocation4 [shape = 's32[1]{0}', space=sflag, size = 0x4, scoped, tag = 'scoped memory for tpu_custom_call.1']
    #allocation5 [shape = 'u8[8192]{0}', space=vmem, size = 0x2000, scoped, tag = 'input window, operand 1, single buffered']
    #allocation6 [shape = 's32[1]{0}', space=sflag, size = 0x4, scoped, tag = 'scoped memory for tpu_custom_call.1']
    #allocation7 [shape = 'u8[16384]{0}', space=vmem, size = 0x4000, scoped, tag = 'input window, operand 2, single buffered']
    #allocation8 [shape = 'u8[8192]{0}', space=vmem, size = 0x2000, scoped, tag = 'output window, operand 0, single buffered']
    %9 = vsyncpa [#allocation3], 0
    %10 = vsyncpa [#allocation6], 0
    %11 = vsyncpa [#allocation4], 0
    // Predicated region
    $region2: #{tpu_custom_call.1} parent=1 // pred_check
      _
    $region3: #{tpu_custom_call.1} parent=1 // pred_check_branch
      %13 = sbr.rel (0) target = $region5
    $region4: #{tpu_custom_call.1} parent=1 // pred_region
      %s15 = ssub.s32 256, 256
      %16 = vsyncadd [#allocation3], %s15
      %s17 = sshll.u32 [#allocation2], 4
      %s18 = int_to_ptr.vmem [resolvable:$true] %s17
      %23 = dma.hbm_to_vmem [thread:$0]  %s0, 256, %s18, [#allocation3], 128, 128, 8
    $region5: #{tpu_custom_call.1} parent=1 // pred_fallthru
      _
    // Predicated region
    $region6: #{tpu_custom_call.1} parent=1 // pred_check
      _
    $region7: #{tpu_custom_call.1} parent=1 // pred_check_branch
      %25 = sbr.rel (0) target = $region9
    $region8: #{tpu_custom_call.1} parent=1 // pred_region
      %s27 = ssub.s32 256, 256
      %28 = vsyncadd [#allocation6], %s27
      %s29 = sshll.u32 [#allocation5], 4
      %s30 = int_to_ptr.vmem [resolvable:$true] %s29
      %35 = dma.hbm_to_vmem [thread:$0]  %s1, 256, %s30, [#allocation6], 128, 128, 8
    $region9: #{tpu_custom_call.1} parent=1 // pred_fallthru
      _
    // Predicated region
    $region10: #{tpu_custom_call.1} parent=1 // pred_check
      _
    $region11: #{tpu_custom_call.1} parent=1 // pred_check_branch
      %37 = sbr.rel (0) target = $region13
    $region12: #{tpu_custom_call.1} parent=1 // pred_region
      %s39 = ssub.s32 512, 512
      %40 = vsyncadd [#allocation6], %s39
      %s41 = sshll.u32 [#allocation7], 4
      %s42 = int_to_ptr.vmem [resolvable:$true] %s41
      %47 = dma.hbm_to_vmem [thread:$0]  %s2, 512, %s42, [#allocation6], 128, 128, 8
    $region13: #{tpu_custom_call.1} parent=1 // pred_fallthru
      _
    // Predicated region
    $region14: #{tpu_custom_call.1} parent=1 // pred_check
      _
    $region15: #{tpu_custom_call.1} parent=1 // pred_check_branch
      %49 = sbr.rel (0) target = $region17
    $region16: #{tpu_custom_call.1} parent=1 // pred_region
      _
    $region17: #{tpu_custom_call.1} parent=1 // pred_fallthru
      _
    // Predicated region
    $region18: #{tpu_custom_call.1} parent=1 // pred_check
      _
    $region19: #{tpu_custom_call.1} parent=1 // pred_check_branch
      %51 = sbr.rel (0) target = $region21
    $region20: #{tpu_custom_call.1} parent=1 // pred_region
      %52 = dma.done [#allocation3], 256
    $region21: #{tpu_custom_call.1} parent=1 // pred_fallthru
      _
    // Predicated region
    $region22: #{tpu_custom_call.1} parent=1 // pred_check
      _
    $region23: #{tpu_custom_call.1} parent=1 // pred_check_branch
      %54 = sbr.rel (0) target = $region25
    $region24: #{tpu_custom_call.1} parent=1 // pred_region
      %55 = dma.done [#allocation6], 256
    $region25: #{tpu_custom_call.1} parent=1 // pred_fallthru
      _
    // Predicated region
    $region26: #{tpu_custom_call.1} parent=1 // pred_check
      _
    $region27: #{tpu_custom_call.1} parent=1 // pred_check_branch
      %57 = sbr.rel (0) target = $region29
    $region28: #{tpu_custom_call.1} parent=1 // pred_region
      %58 = dma.done [#allocation6], 512
    $region29: #{tpu_custom_call.1} parent=1 // pred_fallthru
      _
    %v59 = vld [vmem:[#allocation2] sm:$0xff]
    %v60 = vld [vmem:[#allocation2 + $0x8] sm:$0xff]
    %v61 = vld [vmem:[#allocation7] sm:$0xff]
    %v62 = vld [vmem:[#allocation7 + $0x8] sm:$0xff]
    %v63 = vld [vmem:[#allocation7 + $0x10] sm:$0xff]
    %v64 = vld [vmem:[#allocation7 + $0x18] sm:$0xff]
    %v65 = vld [vmem:[%s3] sm:$0x7]
    %v66 = vlaneseq
    %v67 = vshrl.u32 %v66, 7
    %v68 = vsub.s32 0, %v67
    %v69 = vrot.slane %v65, %v68
    %vm70 = vcmask 261120
    %v72 = vsel %vm70, %v59, 0
    %v75 = vsel %vm70, %v60, 0
    %77 = vmatprep.subr.mxu0 0.0
    %78 = vmatpush1.msra.mxu0 %v61
    %79 = vmatprep.subr.mxu0 0.0
    %80 = vmatpush1.msra.mxu0 %v62
    %81 = vmatprep.subr.mxu0 0.0
    %82 = vmatpush1.msra.mxu0 %v63
    %83 = vmatprep.subr.mxu0 0.0
    %84 = vmatpush1.msra.mxu0 %v64
    %85 = vmatprep.subr.mxu0 0.0
    %86 = vmatpush1.msra.mxu0 0.0
    %87 = vmatprep.subr.mxu0 0.0
    %88 = vmatpush1.msra.mxu0 0.0
    %89 = vmatprep.subr.mxu0 0.0
    %90 = vmatpush1.msra.mxu0 0.0
    %91 = vmatprep.subr.mxu0 0.0
    %92 = vmatpush1.msra.mxu0 0.0
    %93 = vmatprep.subr.mxu0 0.0
    %94 = vmatpush1.msra.mxu0 0.0
    %95 = vmatprep.subr.mxu0 0.0
    %96 = vmatpush1.msra.mxu0 0.0
    %97 = vmatprep.subr.mxu0 0.0
    %98 = vmatpush1.msra.mxu0 0.0
    %99 = vmatprep.subr.mxu0 0.0
    %100 = vmatpush1.msra.mxu0 0.0
    %101 = vmatprep.subr.mxu0 0.0
    %102 = vmatpush1.msra.mxu0 0.0
    %103 = vmatprep.subr.mxu0 0.0
    %104 = vmatpush1.msra.mxu0 0.0
    %105 = vmatprep.subr.mxu0 0.0
    %106 = vmatpush1.msra.mxu0 0.0
    %107 = vmatprep.subr.mxu0 0.0
    %108 = vmatpush1.msra.mxu0 0.0
    %109 = vmatprep.subr.mxu0 0.0
    %110 = vmatpush1.msra.mxu0 0.0
    %111 = vmatprep.subr.mxu0 0.0
    %112 = vmatpush1.msra.mxu0 0.0
    %113 = vmatprep.subr.mxu0 0.0
    %114 = vmatpush1.msra.mxu0 0.0
    %115 = vmatprep.subr.mxu0 0.0
    %116 = vmatpush1.msra.mxu0 0.0
    %117 = vmatprep.subr.mxu0 0.0
    %118 = vmatpush1.msra.mxu0 0.0
    %119 = vmatprep.subr.mxu0 0.0
    %120 = vmatpush1.msra.mxu0 0.0
    %121 = vmatprep.subr.mxu0 0.0
    %122 = vmatpush1.msra.mxu0 0.0
    %123 = vmatprep.subr.mxu0 0.0
    %124 = vmatpush1.msra.mxu0 0.0
    %125 = vmatprep.subr.mxu0 0.0
    %126 = vmatpush1.msra.mxu0 0.0
    %127 = vmatprep.subr.mxu0 0.0
    %128 = vmatpush1.msra.mxu0 0.0
    %129 = vmatprep.subr.mxu0 0.0
    %130 = vmatpush1.msra.mxu0 0.0
    %131 = vmatprep.subr.mxu0 0.0
    %132 = vmatpush1.msra.mxu0 0.0
    %133 = vmatprep.subr.mxu0 0.0
    %134 = vmatpush1.msra.mxu0 0.0
    %135 = vmatprep.subr.mxu0 0.0
    %136 = vmatpush1.msra.mxu0 0.0
    %137 = vmatprep.subr.mxu0 0.0
    %138 = vmatpush1.msra.mxu0 0.0
    %139 = vmatprep.subr.mxu0 0.0
    %140 = vmatpush1.msra.mxu0 0.0
    %141 = vmatprep.mubr.f32.mxu0 0.0
    %142 = vmatmul.mubr.f32.gmra.mrb[0].mxu0 %v72
    %v143 = vpop.f32.mrb[0].mxu0
    %v144 = vadd.f32 %v69, %v143
    %v145 = vpop.f32.mrb[0].mxu0
    %146 = vmatprep.mubr.f32.mxu0 0.0
    %147 = vmatmul.mubr.f32.gmra.mrb[0].mxu0 %v75
    %v148 = vpop.f32.mrb[0].mxu0
    %v149 = vadd.f32 %v69, %v148
    %v150 = vpop.f32.mrb[0].mxu0
    %151 = vdwg.mxu0
    %v152 = vld [vmem:[#allocation5] sm:$0xff]
    %v153 = vld [vmem:[#allocation5 + $0x8] sm:$0xff]
    %v154 = vadd.f32 %v144, %v152
    %v155 = vadd.f32 %v149, %v153
    %v156 = vsel %vm70, %v154, 0.0
    %157 = vadd.xlane.f32.xlu0 %v156
    %v158 = vpop.xlane.xlu0 %157
    %v159 = vsel %vm70, %v155, 0.0
    %160 = vadd.xlane.f32.xlu0 %v159
    %v161 = vpop.xlane.xlu0 %160
    %v162 = vrcp.pop 32.0
    %v163 = vmul.f32 %v158, %v162
    %v164 = vmul.f32 %v161, %v162
    %v165 = vsub.f32 %v154, %v163
    %v166 = vsub.f32 %v155, %v164
    %v167 = vmul.f32 %v165, %v165
    %v168 = vmul.f32 %v166, %v166
    %v169 = vsel %vm70, %v167, 0.0
    %170 = vadd.xlane.f32.xlu0 %v169
    %v171 = vpop.xlane.xlu0 %170
    %v172 = vsel %vm70, %v168, 0.0
    %173 = vadd.xlane.f32.xlu0 %v172
    %v174 = vpop.xlane.xlu0 %173
    %v175 = vmul.f32 %v171, %v162
    %v176 = vmul.f32 %v174, %v162
    %v177 = vadd.f32 %v175, 1e-12
    %v178 = vadd.f32 %v176, 1e-12
    %v179 = vrsqrt.pop %v177
    %v180 = vrsqrt.pop %v178
    %v181 = vmul.f32 %v165, %v179
    %v182 = vmul.f32 %v166, %v180
    %v183 = vlaneseq
    %v184 = vshrl.u32 %v183, 7
    %v185 = vsub.s32 1, %v184
    %v186 = vrot.slane %v65, %v185
    %v187 = vmul.f32 %v181, %v186
    %v188 = vmul.f32 %v182, %v186
    %v189 = vlaneseq
    %v190 = vshrl.u32 %v189, 7
    %v191 = vsub.s32 2, %v190
    %v192 = vrot.slane %v65, %v191
    %v193 = vadd.f32 %v187, %v192
    %v194 = vadd.f32 %v188, %v192
    %195 = vst.msk [vmem:[#allocation8] sm:$0xff] %vm70, %v193
    %196 = vst.msk [vmem:[#allocation8 + $0x8] sm:$0xff] %vm70, %v194
    // Predicated region
    $region30: #{tpu_custom_call.1} parent=1 // pred_check
      _
    $region31: #{tpu_custom_call.1} parent=1 // pred_check_branch
      %198 = sbr.rel (0) target = $region33
    $region32: #{tpu_custom_call.1} parent=1 // pred_region
      %s200 = ssub.s32 256, 256
      %201 = vsyncadd [#allocation4], %s200
      %s202 = sshll.u32 [#allocation8], 4
      %s203 = int_to_ptr.vmem [resolvable:$true] %s202
      %208 = dma.vmem_to_hbm [thread:$0]  %s203, 256, %s4, [#allocation4], 128, 128, 8
    $region33: #{tpu_custom_call.1} parent=1 // pred_fallthru
      _
    // Predicated region
    $region34: #{tpu_custom_call.1} parent=1 // pred_check
      _
    $region35: #{tpu_custom_call.1} parent=1 // pred_check_branch
      %210 = sbr.rel (0) target = $region37
    $region36: #{tpu_custom_call.1} parent=1 // pred_region
      %211 = dma.done [#allocation4], 256
    $region37: #{tpu_custom_call.1} parent=1 // pred_fallthru
      _
    %212 = vsyncpa [#allocation3], 1
    %213 = vsyncpa [#allocation6], 1
    %214 = vsyncpa [#allocation4], 1

</llo_original>
